<compile_context>
chip_gen: v7x
topology: tpu7x:2x2x1
jax: 0.10.0
libtpu: 0.0.40
codegen_flags: <defaults>
</compile_context>

<pallas_src>
import math

import jax
import jax.numpy as jnp
from jax.experimental import pallas as pl
from jax.experimental.pallas import tpu as pltpu


def _lcm(a, b):
    return a * b // math.gcd(a, b)


def cb_attention_kernel(sd_ref, bias_ref, onehot_ref, w12_ref, v_ref, out_ref):
    """One lane tile of TL = S*N lanes (S whole batch segments of N nodes)."""
    oh = onehot_ref[...]                                    # (S, TL), 0/1

    # pre = [W1|W2] @ [static; dynamic]  +  per-segment decoder bias, expanded
    # on the MXU via the one-hot: (H,S) @ (S,TL) with negligible K=S.
    pre = (jnp.dot(w12_ref[...], sd_ref[...], preferred_element_type=jnp.float32)
           + jnp.dot(bias_ref[...], oh, preferred_element_type=jnp.float32))  # (H, TL)
    t = jnp.tanh(pre)                                       # EUP, (H, TL)

    # logits[l] = sum_h v[h] * t[h, l]  -- VPU multiply + sublane reduce.
    # (For H >= ~256 this could move to the MXU; H is small here.)
    logits = jnp.sum(v_ref[...] * t, axis=0, keepdims=True)          # (1, TL) f32

    # Segmented softmax over runs of N lanes.  The expensive op (exp) runs
    # ONCE over (1, TL); per-segment max/sum use the static one-hot.
    mask = oh != 0
    neg = jnp.float32(-1e30)
    lb = jnp.where(mask, logits, neg)                       # (S, TL)
    m_seg = jnp.max(lb, axis=-1, keepdims=True)             # (S, 1)  per-segment max
    m_lane = jnp.sum(oh * m_seg, axis=0, keepdims=True)     # (1, TL) scatter back
    e = jnp.exp(logits - m_lane)                            # (1, TL) single EUP pass
    d_seg = jnp.sum(oh * e, axis=-1, keepdims=True)         # (S, 1)  per-segment sum
    d_lane = jnp.sum(oh * d_seg, axis=0, keepdims=True)     # (1, TL)
    out_ref[...] = (e / d_lane).astype(out_ref.dtype)


def cb_attention(static_hidden, dynamic_hidden, decoder_hidden, v, W, *,
                 target_lanes=1024):
    """static/dynamic: (B, H, N); decoder: (B, H); v: (1,1,H); W: (1,H,3H)."""
    B, H, N = static_hidden.shape
    L = B * N
    dtype = static_hidden.dtype

    # ---- lane-tile geometry -------------------------------------------------
    base = _lcm(N, 128)          # lane-dense tiles holding whole batch segments
    base = _lcm(base, 8 * N)     # keep S = TL // N a multiple of 8 (bias block sublanes)
    min_pad = -(-L // base) * base
    TL = base
    while TL * 2 <= min_pad and TL < target_lanes:
        TL *= 2
    Lp = -(-L // TL) * TL
    n_tiles = Lp // TL
    S = TL // N                  # batch segments per lane tile
    n_seg = Lp // N              # total segments (>= B; extras are zero "phantoms")

    # ---- parameter / activation prep ----------------------------------------
    W2d = W[0]                                   # (H, 3H)
    w12 = W2d[:, :2 * H]                         # (H, 2H)  fused [W1 | W2]
    W3 = W2d[:, 2 * H:]                          # (H, H)
    v_col = jnp.reshape(v[0], (H, 1))            # (H, 1)

    # Stack [static; dynamic] and fold batch into lanes: (2H, B*N) -> (2H, Lp).
    sd = jnp.transpose(jnp.concatenate([static_hidden, dynamic_hidden], axis=1),
                       (1, 0, 2)).reshape(2 * H, L)
    if Lp > L:
        sd = jnp.pad(sd, ((0, 0), (0, Lp - L)))

    # Compact decoder bias: one (H,) vector per batch segment (no (H, B*N) slab).
    bias = decoder_hidden @ W3.T                                    # (B, H)
    if n_seg > B:
        bias = jnp.pad(bias, ((0, n_seg - B), (0, 0)))              # (n_seg, H)
    bias = jnp.transpose(bias.reshape(n_tiles, S, H), (0, 2, 1))    # (n_tiles, H, S)

    # Static lane -> local-segment one-hot (identical for every tile; fetched once).
    seg_of_lane = jnp.arange(TL, dtype=jnp.int32) // N
    onehot = (seg_of_lane[None, :] ==
              jnp.arange(S, dtype=jnp.int32)[:, None]).astype(dtype)   # (S, TL)

    # VMEM budget with headroom (v5e default scoped limit is only 16 MiB;
    # keep the cap below v7x's 64 MiB physical VMEM).
    isz = jnp.dtype(dtype).itemsize
    blocks = 2 * isz * (2 * H * TL + H * S + S * TL + 2 * H * H + H + TL)
    scratch = 4 * (2 * H * TL + 3 * S * TL + 8 * TL)
    vmem_limit = int(min(max(2 * (blocks + scratch), 32 * 1024 * 1024),
                         64 * 1024 * 1024))

    out_flat = pl.pallas_call(
        cb_attention_kernel,
        out_shape=jax.ShapeDtypeStruct((1, Lp), dtype),
        grid=(n_tiles,),
        in_specs=[
            pl.BlockSpec((2 * H, TL), lambda j: (0, j)),       # [S;D] lane tile
            pl.BlockSpec((None, H, S), lambda j: (j, 0, 0)),   # compact decoder bias
            pl.BlockSpec((S, TL), lambda j: (0, 0)),           # one-hot (constant)
            pl.BlockSpec((H, 2 * H), lambda j: (0, 0)),        # fused weights
            pl.BlockSpec((H, 1), lambda j: (0, 0)),            # v column
        ],
        out_specs=pl.BlockSpec((1, TL), lambda j: (0, j)),
        compiler_params=pltpu.CompilerParams(
            dimension_semantics=("parallel",),                 # v7x: 2 TCs split tiles
            vmem_limit_bytes=vmem_limit),
    )(sd, bias, onehot, w12, v_col)

    # Unfold lanes back to the PyTorch output layout (B, 1, N).
    return out_flat[0, :L].reshape(B, 1, N)


def cb_attention_ref(static_hidden, dynamic_hidden, decoder_hidden, v, W):
    """Pure-JAX reference mirroring the PyTorch forward exactly."""
    B, H, N = static_hidden.shape
    hidden = jnp.concatenate(
        [static_hidden, dynamic_hidden,
         jnp.broadcast_to(decoder_hidden[:, :, None], (B, H, N))], axis=1)  # (B, 3H, N)
    Wb = jnp.broadcast_to(W, (B, H, 3 * H))
    vb = jnp.broadcast_to(v, (B, 1, H))
    attns = jnp.einsum('bih,bhn->bin', vb,
                       jnp.tanh(jnp.einsum('bhk,bkn->bhn', Wb, hidden)))
    return jax.nn.softmax(attns, axis=2)


def _run_case(key, B, H, N):
    k1, k2, k3, k4, k5 = jax.random.split(key, 5)
    static_hidden = jax.random.normal(k1, (B, H, N), dtype=jnp.float32)
    dynamic_hidden = jax.random.normal(k2, (B, H, N), dtype=jnp.float32)
    decoder_hidden = jax.random.normal(k3, (B, H), dtype=jnp.float32)

    # Module __init__ uses zeros; use small random params so softmax is non-trivial.
    v = 0.1 * jax.random.normal(k4, (1, 1, H), dtype=jnp.float32)
    W = 0.1 * jax.random.normal(k5, (1, H, 3 * H), dtype=jnp.float32)

    out = cb_attention(static_hidden, dynamic_hidden, decoder_hidden, v, W)
    out = jax.block_until_ready(out)
    ref = cb_attention_ref(static_hidden, dynamic_hidden, decoder_hidden, v, W)
    assert out.shape == (B, 1, N)
    assert jnp.allclose(out, ref, atol=1e-5, rtol=1e-5), \
        f"mismatch vs reference for (B,H,N)=({B},{H},{N})"


if __name__ == "__main__":
    key = jax.random.PRNGKey(0)
    k_a, k_b = jax.random.split(key)
    # Primary small shape implied by the module (single lane tile).
    _run_case(k_a, B=2, H=32, N=8)
    # Larger shape exercising the tiled grid, bias blocking and lane padding.
    _run_case(k_b, B=40, H=64, N=32)
    print("KERNEL_OK")
</pallas_src>

<mosaic_0001>
module attributes {stable_mosaic.version = 11 : i64} {
  func.func @cb_attention_kernel(%arg0: i32, %arg1: memref<64x128xf32, #tpu.memory_space<vmem>>, %arg2: memref<1x32x16xf32, #tpu.memory_space<vmem>>, %arg3: memref<16x128xf32, #tpu.memory_space<vmem>>, %arg4: memref<32x64xf32, #tpu.memory_space<vmem>>, %arg5: memref<32x1xf32, #tpu.memory_space<vmem>>, %arg6: memref<1x128xf32, #tpu.memory_space<vmem>>) attributes {dimension_semantics = [#tpu.dimension_semantics<parallel>], iteration_bounds = array<i64: 1>, scalar_prefetch = 0 : i64, scratch_operands = 0 : i64, tpu.core_type = #tpu.core_type<tc>, window_params = [{transform_indices = @transform_0, window_bounds = array<i64: 64, 128>}, {transform_indices = @transform_1, window_bounds = array<i64: 1, 32, 16>}, {pipeline_mode = #tpu.pipeline_mode<synchronous>, transform_indices = @transform_2, window_bounds = array<i64: 16, 128>}, {pipeline_mode = #tpu.pipeline_mode<synchronous>, transform_indices = @transform_3, window_bounds = array<i64: 32, 64>}, {pipeline_mode = #tpu.pipeline_mode<synchronous>, transform_indices = @transform_4, window_bounds = array<i64: 32, 1>}, {transform_indices = @transform_5, window_bounds = array<i64: 1, 128>}]} {
    %c0 = arith.constant 0 : index
    %c0_0 = arith.constant 0 : index
    %0 = vector.load %arg3[%c0, %c0_0] : memref<16x128xf32, #tpu.memory_space<vmem>>, vector<16x128xf32>
    %c0_1 = arith.constant 0 : index
    %c0_2 = arith.constant 0 : index
    %1 = vector.load %arg4[%c0_1, %c0_2] : memref<32x64xf32, #tpu.memory_space<vmem>>, vector<32x64xf32>
    %c0_3 = arith.constant 0 : index
    %c0_4 = arith.constant 0 : index
    %2 = vector.load %arg1[%c0_3, %c0_4] : memref<64x128xf32, #tpu.memory_space<vmem>>, vector<64x128xf32>
    %cst = arith.constant dense<0.000000e+00> : vector<32x128xf32>
    %3 = tpu.matmul %1, %2, %cst {dimension_numbers = #tpu.dot_dimension_numbers<[1], [0], [0], [1], [0, 0, 1, 1], [], []>} : vector<32x64xf32>, vector<64x128xf32>, vector<32x128xf32> -> vector<32x128xf32>
    %c0_5 = arith.constant 0 : index
    %c0_6 = arith.constant 0 : index
    %c0_7 = arith.constant 0 : index
    %4 = vector.load %arg2[%c0_5, %c0_6, %c0_7] : memref<1x32x16xf32, #tpu.memory_space<vmem>>, vector<1x32x16xf32>
    %5 = vector.shape_cast %4 : vector<1x32x16xf32> to vector<32x16xf32>
    %cst_8 = arith.constant dense<0.000000e+00> : vector<32x128xf32>
    %6 = tpu.matmul %5, %0, %cst_8 {dimension_numbers = #tpu.dot_dimension_numbers<[1], [0], [0], [1], [0, 0, 1, 1], [], []>} : vector<32x16xf32>, vector<16x128xf32>, vector<32x128xf32> -> vector<32x128xf32>
    %7 = arith.addf %3, %6 : vector<32x128xf32>
    %8 = math.tanh %7 : vector<32x128xf32>
    %c0_9 = arith.constant 0 : index
    %c0_10 = arith.constant 0 : index
    %9 = vector.load %arg5[%c0_9, %c0_10] : memref<32x1xf32, #tpu.memory_space<vmem>>, vector<32x1xf32>
    %10 = vector.broadcast %9 : vector<32x1xf32> to vector<32x128xf32>
    %11 = arith.mulf %10, %8 : vector<32x128xf32>
    %cst_11 = arith.constant dense<0.000000e+00> : vector<128xf32>
    %12 = vector.multi_reduction <add>, %11, %cst_11 [0] : vector<32x128xf32> to vector<128xf32>
    %13 = vector.shape_cast %12 : vector<128xf32> to vector<1x128xf32>
    %cst_12 = arith.constant 0.000000e+00 : f32
    %14 = vector.broadcast %cst_12 : f32 to vector<16x128xf32>
    %15 = arith.cmpf one, %0, %14 : vector<16x128xf32>
    %cst_13 = arith.constant -1.000000e+30 : f32
    %16 = vector.shape_cast %13 : vector<1x128xf32> to vector<1x128xf32>
    %17 = vector.broadcast %16 : vector<1x128xf32> to vector<16x128xf32>
    %18 = vector.broadcast %cst_13 : f32 to vector<16x128xf32>
    %19 = arith.select %15, %17, %18 : vector<16x128xi1>, vector<16x128xf32>
    %cst_14 = arith.constant dense<0xFF800000> : vector<16xf32>
    %20 = vector.multi_reduction <maximumf>, %19, %cst_14 [1] : vector<16x128xf32> to vector<16xf32>
    %21 = vector.shape_cast %20 : vector<16xf32> to vector<16x1xf32>
    %22 = vector.broadcast %21 : vector<16x1xf32> to vector<16x128xf32>
    %23 = arith.mulf %0, %22 : vector<16x128xf32>
    %cst_15 = arith.constant dense<0.000000e+00> : vector<128xf32>
    %24 = vector.multi_reduction <add>, %23, %cst_15 [0] : vector<16x128xf32> to vector<128xf32>
    %25 = vector.shape_cast %24 : vector<128xf32> to vector<1x128xf32>
    %26 = arith.subf %13, %25 : vector<1x128xf32>
    %27 = math.exp %26 : vector<1x128xf32>
    %28 = vector.broadcast %27 : vector<1x128xf32> to vector<16x128xf32>
    %29 = arith.mulf %0, %28 : vector<16x128xf32>
    %cst_16 = arith.constant dense<0.000000e+00> : vector<16xf32>
    %30 = vector.multi_reduction <add>, %29, %cst_16 [1] : vector<16x128xf32> to vector<16xf32>
    %31 = vector.shape_cast %30 : vector<16xf32> to vector<16x1xf32>
    %32 = vector.broadcast %31 : vector<16x1xf32> to vector<16x128xf32>
    %33 = arith.mulf %0, %32 : vector<16x128xf32>
    %cst_17 = arith.constant dense<0.000000e+00> : vector<128xf32>
    %34 = vector.multi_reduction <add>, %33, %cst_17 [0] : vector<16x128xf32> to vector<128xf32>
    %35 = vector.shape_cast %34 : vector<128xf32> to vector<1x128xf32>
    %36 = arith.divf %27, %35 : vector<1x128xf32>
    %c0_18 = arith.constant 0 : index
    %c0_19 = arith.constant 0 : index
    %37 = vector.load %arg6[%c0_18, %c0_19] : memref<1x128xf32, #tpu.memory_space<vmem>>, vector<1x128xf32>
    tpu.vector_store %arg6[%c0_18, %c0_19], %36 {strides = array<i32>} : memref<1x128xf32, #tpu.memory_space<vmem>>, vector<1x128xf32>,
    return
  }
  func.func @transform_0(%arg0: i32) -> (i32, i32) {
    %c0_i32 = arith.constant 0 : i32
    %c0_i32_0 = arith.constant 0 : i32
    return %c0_i32, %arg0 : i32, i32
  }
  func.func @transform_1(%arg0: i32) -> (i32, i32, i32) {
    %c0_i32 = arith.constant 0 : i32
    %c0_i32_0 = arith.constant 0 : i32
    %c0_i32_1 = arith.constant 0 : i32
    return %arg0, %c0_i32, %c0_i32_0 : i32, i32, i32
  }
  func.func @transform_2(%arg0: i32) -> (i32, i32) {
    %c0_i32 = arith.constant 0 : i32
    %c0_i32_0 = arith.constant 0 : i32
    %c0_i32_1 = arith.constant 0 : i32
    return %c0_i32, %c0_i32_0 : i32, i32
  }
  func.func @transform_3(%arg0: i32) -> (i32, i32) {
    %c0_i32 = arith.constant 0 : i32
    %c0_i32_0 = arith.constant 0 : i32
    %c0_i32_1 = arith.constant 0 : i32
    return %c0_i32, %c0_i32_0 : i32, i32
  }
  func.func @transform_4(%arg0: i32) -> (i32, i32) {
    %c0_i32 = arith.constant 0 : i32
    %c0_i32_0 = arith.constant 0 : i32
    %c0_i32_1 = arith.constant 0 : i32
    return %c0_i32, %c0_i32_0 : i32, i32
  }
  func.func @transform_5(%arg0: i32) -> (i32, i32) {
    %c0_i32 = arith.constant 0 : i32
    %c0_i32_0 = arith.constant 0 : i32
    return %c0_i32, %arg0 : i32, i32
  }
}

</mosaic_0001>

<llo_original>
// kernel: tpu_custom_call.1
$region0: #{tpu_custom_call.1}
  #allocation0 [shape = 'u32[]', space=smem, size = 0x4, offset = 0x4, fixed_abs, tag = 'smem constant byte address 0x4 - core index']
  #allocation1 [shape = 'u32[144,128]{1,0:T(1,128)}', space=vmem, size = 0x12000, scoped, tag = 'internal scratch']
  %s0 = inlined_call_operand.vmem [shape: f32[64,128], index: 0, kind: input, shape index: {}]
  %s1 = inlined_call_operand.vmem [shape: f32[1,32,16], index: 1, kind: input, shape index: {}]
  %s2 = inlined_call_operand.vmem [shape: f32[16,128], index: 2, kind: input, shape index: {}]
  %s3 = inlined_call_operand.hbm [shape: f32[32,64], index: 3, kind: input, shape index: {}]
  %s4 = inlined_call_operand.vmem [shape: f32[32,1], index: 4, kind: input, shape index: {}]
  %s5 = inlined_call_operand.hbm [shape: f32[1,128], index: 5, kind: output, shape index: {}]
  %s6 = sld [smem:[#allocation0]]
  $region34: #{tpu_custom_call.1} parent=0
    _
  %s8 = ssub.s32 1, %s6
  %s9 = scalar_select 0, %s8, %s6
  $region1: #{tpu_custom_call.1} parent=0
    #allocation2 [shape = 'u8[16384]{0}', space=vmem, size = 0x4000, scoped, tag = 'input window, operand 3, single buffered']
    #allocation3 [shape = 's32[1]{0}', space=sflag, size = 0x4, scoped, tag = 'scoped memory for tpu_custom_call.1']
    #allocation4 [shape = 's32[1]{0}', space=sflag, size = 0x4, scoped, tag = 'scoped memory for tpu_custom_call.1']
    #allocation5 [shape = 'u8[512]{0}', space=vmem, size = 0x400, scoped, tag = 'output window, operand 0, single buffered']
    %10 = vsyncpa [#allocation3], 0
    %11 = vsyncpa [#allocation4], 0
    // Predicated region
    $region2: #{tpu_custom_call.1} parent=1 // pred_check
      _
    $region3: #{tpu_custom_call.1} parent=1 // pred_check_branch
      %13 = sbr.rel (0) target = $region5
    $region4: #{tpu_custom_call.1} parent=1 // pred_region
      _
    $region5: #{tpu_custom_call.1} parent=1 // pred_fallthru
      _
    // Predicated region
    $region6: #{tpu_custom_call.1} parent=1 // pred_check
      _
    $region7: #{tpu_custom_call.1} parent=1 // pred_check_branch
      %15 = sbr.rel (0) target = $region9
    $region8: #{tpu_custom_call.1} parent=1 // pred_region
      _
    $region9: #{tpu_custom_call.1} parent=1 // pred_fallthru
      _
    // Predicated region
    $region10: #{tpu_custom_call.1} parent=1 // pred_check
      _
    $region11: #{tpu_custom_call.1} parent=1 // pred_check_branch
      %17 = sbr.rel (0) target = $region13
    $region12: #{tpu_custom_call.1} parent=1 // pred_region
      _
    $region13: #{tpu_custom_call.1} parent=1 // pred_fallthru
      _
    // Predicated region
    $region14: #{tpu_custom_call.1} parent=1 // pred_check
      _
    $region15: #{tpu_custom_call.1} parent=1 // pred_check_branch
      %19 = sbr.rel (0) target = $region17
    $region16: #{tpu_custom_call.1} parent=1 // pred_region
      %s21 = ssub.s32 512, 512
      %22 = vsyncadd [#allocation3], %s21
      %s23 = sshll.u32 [#allocation2], 4
      %s24 = int_to_ptr.vmem [resolvable:$true] %s23
      %29 = dma.hbm_to_vmem [thread:$0]  %s3, 512, %s24, [#allocation3], 128, 128, 8
    $region17: #{tpu_custom_call.1} parent=1 // pred_fallthru
      _
    // Predicated region
    $region18: #{tpu_custom_call.1} parent=1 // pred_check
      _
    $region19: #{tpu_custom_call.1} parent=1 // pred_check_branch
      %31 = sbr.rel (0) target = $region21
    $region20: #{tpu_custom_call.1} parent=1 // pred_region
      _
    $region21: #{tpu_custom_call.1} parent=1 // pred_fallthru
      _
    // Predicated region
    $region22: #{tpu_custom_call.1} parent=1 // pred_check
      _
    $region23: #{tpu_custom_call.1} parent=1 // pred_check_branch
      %33 = sbr.rel (0) target = $region25
    $region24: #{tpu_custom_call.1} parent=1 // pred_region
      %34 = dma.done [#allocation3], 512
    $region25: #{tpu_custom_call.1} parent=1 // pred_fallthru
      _
    %v35 = vld [vmem:[%s2] sm:$0xff]
    %v36 = vld [vmem:[%s2 + $0x8] sm:$0xff]
    %v37 = vld [vmem:[#allocation2] sm:$0xff]
    %v38 = vld [vmem:[#allocation2 + $0x8] sm:$0xff]
    %v39 = vld [vmem:[#allocation2 + $0x10] sm:$0xff]
    %v40 = vld [vmem:[#allocation2 + $0x18] sm:$0xff]
    %v41 = vld [vmem:[%s0] sm:$0xff]
    %v42 = vld [vmem:[%s0 + $0x8] sm:$0xff]
    %v43 = vld [vmem:[%s0 + $0x10] sm:$0xff]
    %v44 = vld [vmem:[%s0 + $0x18] sm:$0xff]
    %v45 = vld [vmem:[%s0 + $0x20] sm:$0xff]
    %v46 = vld [vmem:[%s0 + $0x28] sm:$0xff]
    %v47 = vld [vmem:[%s0 + $0x30] sm:$0xff]
    %v48 = vld [vmem:[%s0 + $0x38] sm:$0xff]
    %v49 = vld [vmem:[%s1] sm:$0xff]
    %v50 = vld [vmem:[%s1 + $0x8] sm:$0xff]
    %v51 = vld [vmem:[%s1 + $0x10] sm:$0xff]
    %v52 = vld [vmem:[%s1 + $0x18] sm:$0xff]
    %vm53 = vcmask 130048
    %v55 = vsel %vm53, %v49, 0
    %v58 = vsel %vm53, %v50, 0
    %v61 = vsel %vm53, %v51, 0
    %v64 = vsel %vm53, %v52, 0
    %66 = vmatprep.subr.mxu0 0.0
    %67 = vmatpush1.msra.mxu0 %v35
    %68 = vmatprep.subr.mxu0 0.0
    %69 = vmatpush1.msra.mxu0 %v36
    %70 = vmatprep.subr.mxu0 0.0
    %71 = vmatpush1.msra.mxu0 0.0
    %72 = vmatprep.subr.mxu0 0.0
    %73 = vmatpush1.msra.mxu0 0.0
    %74 = vmatprep.subr.mxu0 0.0
    %75 = vmatpush1.msra.mxu0 0.0
    %76 = vmatprep.subr.mxu0 0.0
    %77 = vmatpush1.msra.mxu0 0.0
    %78 = vmatprep.subr.mxu0 0.0
    %79 = vmatpush1.msra.mxu0 0.0
    %80 = vmatprep.subr.mxu0 0.0
    %81 = vmatpush1.msra.mxu0 0.0
    %82 = vmatprep.subr.mxu0 0.0
    %83 = vmatpush1.msra.mxu0 0.0
    %84 = vmatprep.subr.mxu0 0.0
    %85 = vmatpush1.msra.mxu0 0.0
    %86 = vmatprep.subr.mxu0 0.0
    %87 = vmatpush1.msra.mxu0 0.0
    %88 = vmatprep.subr.mxu0 0.0
    %89 = vmatpush1.msra.mxu0 0.0
    %90 = vmatprep.subr.mxu0 0.0
    %91 = vmatpush1.msra.mxu0 0.0
    %92 = vmatprep.subr.mxu0 0.0
    %93 = vmatpush1.msra.mxu0 0.0
    %94 = vmatprep.subr.mxu0 0.0
    %95 = vmatpush1.msra.mxu0 0.0
    %96 = vmatprep.subr.mxu0 0.0
    %97 = vmatpush1.msra.mxu0 0.0
    %98 = vmatprep.subr.mxu0 0.0
    %99 = vmatpush1.msra.mxu0 0.0
    %100 = vmatprep.subr.mxu0 0.0
    %101 = vmatpush1.msra.mxu0 0.0
    %102 = vmatprep.subr.mxu0 0.0
    %103 = vmatpush1.msra.mxu0 0.0
    %104 = vmatprep.subr.mxu0 0.0
    %105 = vmatpush1.msra.mxu0 0.0
    %106 = vmatprep.subr.mxu0 0.0
    %107 = vmatpush1.msra.mxu0 0.0
    %108 = vmatprep.subr.mxu0 0.0
    %109 = vmatpush1.msra.mxu0 0.0
    %110 = vmatprep.subr.mxu0 0.0
    %111 = vmatpush1.msra.mxu0 0.0
    %112 = vmatprep.subr.mxu0 0.0
    %113 = vmatpush1.msra.mxu0 0.0
    %114 = vmatprep.subr.mxu0 0.0
    %115 = vmatpush1.msra.mxu0 0.0
    %116 = vmatprep.subr.mxu0 0.0
    %117 = vmatpush1.msra.mxu0 0.0
    %118 = vmatprep.subr.mxu0 0.0
    %119 = vmatpush1.msra.mxu0 0.0
    %120 = vmatprep.subr.mxu0 0.0
    %121 = vmatpush1.msra.mxu0 0.0
    %122 = vmatprep.subr.mxu0 0.0
    %123 = vmatpush1.msra.mxu0 0.0
    %124 = vmatprep.subr.mxu0 0.0
    %125 = vmatpush1.msra.mxu0 0.0
    %126 = vmatprep.subr.mxu0 0.0
    %127 = vmatpush1.msra.mxu0 0.0
    %128 = vmatprep.subr.mxu0 0.0
    %129 = vmatpush1.msra.mxu0 0.0
    %130 = vmatprep.mubr.f32.mxu0 0.0
    %131 = vmatmul.mubr.f32.gmra.mrb[0].mxu0 %v55
    %v132 = vpop.f32.mrb[0].mxu0
    %v133 = vadd.f32 0.0, %v132
    %v134 = vpop.f32.mrb[0].mxu0
    %135 = vmatprep.mubr.f32.mxu0 0.0
    %136 = vmatmul.mubr.f32.gmra.mrb[0].mxu0 %v58
    %v137 = vpop.f32.mrb[0].mxu0
    %v138 = vadd.f32 0.0, %v137
    %v139 = vpop.f32.mrb[0].mxu0
    %140 = vmatprep.mubr.f32.mxu0 0.0
    %141 = vmatmul.mubr.f32.gmra.mrb[0].mxu0 %v61
    %v142 = vpop.f32.mrb[0].mxu0
    %v143 = vadd.f32 0.0, %v142
    %v144 = vpop.f32.mrb[0].mxu0
    %145 = vmatprep.mubr.f32.mxu0 0.0
    %146 = vmatmul.mubr.f32.gmra.mrb[0].mxu0 %v64
    %v147 = vpop.f32.mrb[0].mxu0
    %v148 = vadd.f32 0.0, %v147
    %v149 = vpop.f32.mrb[0].mxu0
    %150 = vdwg.mxu0
    %vm151 = vcmask 523264
    %v153 = vsel %vm151, %v37, 0
    %v156 = vsel %vm151, %v38, 0
    %v159 = vsel %vm151, %v39, 0
    %v162 = vsel %vm151, %v40, 0
    %164 = vmatprep.subr.mxu0 0.0
    %165 = vmatpush1.msra.mxu0 %v41
    %166 = vmatprep.subr.mxu0 0.0
    %167 = vmatpush1.msra.mxu0 %v42
    %168 = vmatprep.subr.mxu0 0.0
    %169 = vmatpush1.msra.mxu0 %v43
    %170 = vmatprep.subr.mxu0 0.0
    %171 = vmatpush1.msra.mxu0 %v44
    %172 = vmatprep.subr.mxu0 0.0
    %173 = vmatpush1.msra.mxu0 %v45
    %174 = vmatprep.subr.mxu0 0.0
    %175 = vmatpush1.msra.mxu0 %v46
    %176 = vmatprep.subr.mxu0 0.0
    %177 = vmatpush1.msra.mxu0 %v47
    %178 = vmatprep.subr.mxu0 0.0
    %179 = vmatpush1.msra.mxu0 %v48
    %180 = vmatprep.subr.mxu0 0.0
    %181 = vmatpush1.msra.mxu0 0.0
    %182 = vmatprep.subr.mxu0 0.0
    %183 = vmatpush1.msra.mxu0 0.0
    %184 = vmatprep.subr.mxu0 0.0
    %185 = vmatpush1.msra.mxu0 0.0
    %186 = vmatprep.subr.mxu0 0.0
    %187 = vmatpush1.msra.mxu0 0.0
    %188 = vmatprep.subr.mxu0 0.0
    %189 = vmatpush1.msra.mxu0 0.0
    %190 = vmatprep.subr.mxu0 0.0
    %191 = vmatpush1.msra.mxu0 0.0
    %192 = vmatprep.subr.mxu0 0.0
    %193 = vmatpush1.msra.mxu0 0.0
    %194 = vmatprep.subr.mxu0 0.0
    %195 = vmatpush1.msra.mxu0 0.0
    %196 = vmatprep.subr.mxu0 0.0
    %197 = vmatpush1.msra.mxu0 0.0
    %198 = vmatprep.subr.mxu0 0.0
    %199 = vmatpush1.msra.mxu0 0.0
    %200 = vmatprep.subr.mxu0 0.0
    %201 = vmatpush1.msra.mxu0 0.0
    %202 = vmatprep.subr.mxu0 0.0
    %203 = vmatpush1.msra.mxu0 0.0
    %204 = vmatprep.subr.mxu0 0.0
    %205 = vmatpush1.msra.mxu0 0.0
    %206 = vmatprep.subr.mxu0 0.0
    %207 = vmatpush1.msra.mxu0 0.0
    %208 = vmatprep.subr.mxu0 0.0
    %209 = vmatpush1.msra.mxu0 0.0
    %210 = vmatprep.subr.mxu0 0.0
    %211 = vmatpush1.msra.mxu0 0.0
    %212 = vmatprep.subr.mxu0 0.0
    %213 = vmatpush1.msra.mxu0 0.0
    %214 = vmatprep.subr.mxu0 0.0
    %215 = vmatpush1.msra.mxu0 0.0
    %216 = vmatprep.subr.mxu0 0.0
    %217 = vmatpush1.msra.mxu0 0.0
    %218 = vmatprep.subr.mxu0 0.0
    %219 = vmatpush1.msra.mxu0 0.0
    %220 = vmatprep.subr.mxu0 0.0
    %221 = vmatpush1.msra.mxu0 0.0
    %222 = vmatprep.subr.mxu0 0.0
    %223 = vmatpush1.msra.mxu0 0.0
    %224 = vmatprep.subr.mxu0 0.0
    %225 = vmatpush1.msra.mxu0 0.0
    %226 = vmatprep.subr.mxu0 0.0
    %227 = vmatpush1.msra.mxu0 0.0
    %228 = vmatprep.mubr.f32.mxu0 0.0
    %229 = vmatmul.mubr.f32.gmra.mrb[0].mxu0 %v153
    %v230 = vpop.f32.mrb[0].mxu0
    %v231 = vadd.f32 %v133, %v230
    %v232 = vpop.f32.mrb[0].mxu0
    %233 = vmatprep.mubr.f32.mxu0 0.0
    %234 = vmatmul.mubr.f32.gmra.mrb[0].mxu0 %v156
    %v235 = vpop.f32.mrb[0].mxu0
    %v236 = vadd.f32 %v138, %v235
    %v237 = vpop.f32.mrb[0].mxu0
    %238 = vmatprep.mubr.f32.mxu0 0.0
    %239 = vmatmul.mubr.f32.gmra.mrb[0].mxu0 %v159
    %v240 = vpop.f32.mrb[0].mxu0
    %v241 = vadd.f32 %v143, %v240
    %v242 = vpop.f32.mrb[0].mxu0
    %243 = vmatprep.mubr.f32.mxu0 0.0
    %244 = vmatmul.mubr.f32.gmra.mrb[0].mxu0 %v162
    %v245 = vpop.f32.mrb[0].mxu0
    %v246 = vadd.f32 %v148, %v245
    %v247 = vpop.f32.mrb[0].mxu0
    %248 = vdwg.mxu0
    %v249 = vtanh.pop %v231
    %v250 = vtanh.pop %v236
    %v251 = vtanh.pop %v241
    %v252 = vtanh.pop %v246
    %v253 = vld [vmem:[%s4] sm:$0xff]
    %v254 = vld [vmem:[%s4 + $0x8] sm:$0xff]
    %v255 = vld [vmem:[%s4 + $0x10] sm:$0xff]
    %v256 = vld [vmem:[%s4 + $0x18] sm:$0xff]
    %258 = vset.pattern.permute.xlu0 0
    %259 = vperm.xlu0 %258, %v253
    %v260 = vpop.permute.xlu0 %259
    %263 = vset.pattern.permute.xlu0 0
    %264 = vperm.xlu0 %263, %v254
    %v265 = vpop.permute.xlu0 %264
    %268 = vset.pattern.permute.xlu0 0
    %269 = vperm.xlu0 %268, %v255
    %v270 = vpop.permute.xlu0 %269
    %273 = vset.pattern.permute.xlu0 0
    %274 = vperm.xlu0 %273, %v256
    %v275 = vpop.permute.xlu0 %274
    %v277 = vmul.f32 %v260, %v249
    %v278 = vmul.f32 %v265, %v250
    %v279 = vmul.f32 %v270, %v251
    %v280 = vmul.f32 %v275, %v252
    %v281 = vadd.f32 %v277, %v278
    %v282 = vadd.f32 %v281, %v279
    %v283 = vadd.f32 %v282, %v280
    %v284 = vrot.slane %v283, 4
    %v285 = vadd.f32 %v283, %v284
    %v286 = vrot.slane %v285, 2
    %v287 = vadd.f32 %v285, %v286
    %v288 = vrot.slane %v287, 1
    %v289 = vadd.f32 %v287, %v288
    %vm290 = vcmp.ne.f32.partialorder %v35, 0.0
    %vm291 = vcmp.ne.f32.partialorder %v36, 0.0
    %v292 = vsel %vm290, %v289, -1e+30
    %v293 = vsel %vm291, %v289, -1e+30
    %294 = vmax.xlane.f32.xlu0 %v292
    %v295 = vpop.xlane.xlu0 %294
    %296 = vmax.xlane.f32.xlu0 %v293
    %v297 = vpop.xlane.xlu0 %296
    %v298 = vmul.f32 %v35, %v295
    %v299 = vmul.f32 %v36, %v297
    %v300 = vadd.f32 %v298, %v299
    %v301 = vrot.slane %v300, 4
    %v302 = vadd.f32 %v300, %v301
    %v303 = vrot.slane %v302, 2
    %v304 = vadd.f32 %v302, %v303
    %v305 = vrot.slane %v304, 1
    %v306 = vadd.f32 %v304, %v305
    %v307 = vsub.f32 %v289, %v306
    %v308 = vmul.f32 %v307, 1.442695
    %v309 = vpow.pop %v308
    %v310 = vmul.f32 %v35, %v309
    %v311 = vmul.f32 %v36, %v309
    %312 = vadd.xlane.f32.xlu0 %v310
    %v313 = vpop.xlane.xlu0 %312
    %314 = vadd.xlane.f32.xlu0 %v311
    %v315 = vpop.xlane.xlu0 %314
    %v316 = vmul.f32 %v35, %v313
    %v317 = vmul.f32 %v36, %v315
    %v318 = vadd.f32 %v316, %v317
    %v319 = vrot.slane %v318, 4
    %v320 = vadd.f32 %v318, %v319
    %v321 = vrot.slane %v320, 2
    %v322 = vadd.f32 %v320, %v321
    %v323 = vrot.slane %v322, 1
    %v324 = vadd.f32 %v322, %v323
    %v325 = vrcp.pop %v324
    %v326 = vmul.f32 %v309, %v325
    %327 = vst [vmem:[#allocation5] sm:$0x1] %v326
    // Predicated region
    $region26: #{tpu_custom_call.1} parent=1 // pred_check
      _
    $region27: #{tpu_custom_call.1} parent=1 // pred_check_branch
      %329 = sbr.rel (0) target = $region29
    $region28: #{tpu_custom_call.1} parent=1 // pred_region
      %s331 = ssub.s32 16, 16
      %332 = vsyncadd [#allocation4], %s331
      %s334 = sshll.u32 [#allocation5], 4
      %s335 = int_to_ptr.vmem [resolvable:$true] %s334
      %337 = dma.vmem_to_hbm [thread:$0]  %s335, 16, %s5, [#allocation4]
    $region29: #{tpu_custom_call.1} parent=1 // pred_fallthru
      _
    // Predicated region
    $region30: #{tpu_custom_call.1} parent=1 // pred_check
      _
    $region31: #{tpu_custom_call.1} parent=1 // pred_check_branch
      %339 = sbr.rel (0) target = $region33
    $region32: #{tpu_custom_call.1} parent=1 // pred_region
      %340 = dma.done [#allocation4], 16
    $region33: #{tpu_custom_call.1} parent=1 // pred_fallthru
      _
    %341 = vsyncpa [#allocation3], 1
    %342 = vsyncpa [#allocation4], 1

</llo_original>
